<compile_context>
chip_gen: v7x
topology: tpu7x:2x2x1
jax: 0.10.0
libtpu: 0.0.40
codegen_flags: <defaults>
</compile_context>

<pallas_src>
import jax
import jax.numpy as jnp
from jax.experimental import pallas as pl
from jax.experimental.pallas import tpu as pltpu

C_IN = 120    # conv2d21 in
C_MID = 32    # conv2d21 out / conv2d22 in
C_OUT = 120   # conv2d22 out


def _se_kernel(x_ref, w1_ref, b1_ref, w2_ref, b2_ref, o_ref):
    # x_ref : (1, C_IN, TL)    w1_ref: (C_MID, C_IN)   b1_ref: (C_MID, 1)
    # o_ref : (1, C_OUT, TL)   w2_ref: (C_OUT, C_MID)  b2_ref: (C_OUT, 1)
    x = x_ref[0]                                                   # (C_IN, TL)

    # conv2d21 (1x1): W1 @ x + b1   (channels on sublanes, spatial on lanes)
    h = jnp.dot(w1_ref[...], x, preferred_element_type=jnp.float32) + b1_ref[...]
    # relu13
    h = jnp.maximum(h, 0.0)
    # conv2d22 (1x1): W2 @ h + b2
    y = jnp.dot(w2_ref[...], h, preferred_element_type=jnp.float32) + b2_ref[...]
    # hardsigmoid2: clip(x/6 + 1/2, 0, 1)
    y = jnp.clip(y * (1.0 / 6.0) + 0.5, 0.0, 1.0)

    o_ref[0] = y.astype(o_ref.dtype)


def _round_up(a, b):
    return (a + b - 1) // b * b


def _choose_tile_l(hw, n_batch, tile_l):
    """Lane tile: multiple of 128 (or the full extent), capped so the grid has
    >=2 total steps when there is enough work (pipelining + v7x megacore)."""
    tile_l = max(128, (tile_l // 128) * 128)
    if hw > tile_l:
        return tile_l                       # tiled; ragged tail block is masked
    if n_batch >= 2 or hw <= 128:
        return hw                           # single full-extent block (always legal)
    # Single batch, 128 < hw <= tile_l: split into >=2 lane blocks.
    return _round_up(-(-hw // 2), 128)


def se_block(x_nchw, w1, b1, w2, b2, *, tile_l=8192):
    """x_nchw: (N, 120, H, W) f32.  w1:(32,120) b1:(32,1) w2:(120,32) b2:(120,1).
    Returns (N, 120, H, W) f32."""
    n, c, h, w = x_nchw.shape
    assert c == C_IN
    hw = h * w

    x3 = x_nchw.reshape(n, C_IN, hw)        # free in NCHW (H,W contiguous)
    tl = _choose_tile_l(hw, n, tile_l)
    grid = (n, pl.cdiv(hw, tl))

    flops = 2 * n * hw * (C_IN * C_MID + C_MID * C_OUT)
    bytes_accessed = 4 * (n * hw * (C_IN + C_OUT)          # activation read + write
                          + C_IN * C_MID + C_MID * C_OUT   # weights
                          + C_MID + C_OUT)                  # biases

    out3 = pl.pallas_call(
        _se_kernel,
        out_shape=jax.ShapeDtypeStruct((n, C_OUT, hw), jnp.float32),
        grid_spec=pltpu.PrefetchScalarGridSpec(
            num_scalar_prefetch=0,
            grid=grid,
            in_specs=[
                pl.BlockSpec((1, C_IN, tl), lambda b, l: (b, 0, l)),   # activations
                pl.BlockSpec((C_MID, C_IN), lambda b, l: (0, 0)),      # W1 (resident)
                pl.BlockSpec((C_MID, 1), lambda b, l: (0, 0)),         # b1
                pl.BlockSpec((C_OUT, C_MID), lambda b, l: (0, 0)),     # W2 (resident)
                pl.BlockSpec((C_OUT, 1), lambda b, l: (0, 0)),         # b2
            ],
            out_specs=pl.BlockSpec((1, C_OUT, tl), lambda b, l: (b, 0, l)),
        ),
        compiler_params=pltpu.CompilerParams(
            dimension_semantics=("parallel", "parallel"),   # shards across v7x TCs
            vmem_limit_bytes=32 * 1024 * 1024,
        ),
        cost_estimate=pl.CostEstimate(
            flops=flops, transcendentals=0, bytes_accessed=bytes_accessed),
    )(x3, w1, b1, w2, b2)

    return out3.reshape(n, C_OUT, h, w)


def _reference(x_nchw, w1, b1, w2, b2):
    n, _, h, w = x_nchw.shape
    x3 = x_nchw.reshape(n, C_IN, h * w)
    hmid = jnp.maximum(jnp.einsum('oi,nil->nol', w1, x3) + b1[None], 0.0)
    y = jnp.einsum('oi,nil->nol', w2, hmid) + b2[None]
    y = jnp.clip(y / 6.0 + 0.5, 0.0, 1.0)
    return y.reshape(n, C_OUT, h, w)


def init_params(key):
    # PyTorch Conv2d default init: uniform(+/- 1/sqrt(fan_in)); weights kept as (out, in).
    k1, k2, k3, k4 = jax.random.split(key, 4)
    bound1 = 1.0 / (C_IN ** 0.5)
    bound2 = 1.0 / (C_MID ** 0.5)
    w1 = jax.random.uniform(k1, (C_MID, C_IN), jnp.float32, -bound1, bound1)
    b1 = jax.random.uniform(k2, (C_MID, 1), jnp.float32, -bound1, bound1)
    w2 = jax.random.uniform(k3, (C_OUT, C_MID), jnp.float32, -bound2, bound2)
    b2 = jax.random.uniform(k4, (C_OUT, 1), jnp.float32, -bound2, bound2)
    return w1, b1, w2, b2


if __name__ == "__main__":
    key = jax.random.PRNGKey(0)
    kp, kx = jax.random.split(key)
    w1, b1, w2, b2 = init_params(kp)

    # 1) True SE-case shape from the module (H=W=1), batch=2.
    x = jax.random.normal(kx, (2, C_IN, 1, 1), jnp.float32)
    out = se_block(x, w1, b1, w2, b2)
    jax.block_until_ready(out)
    assert out.shape == (2, C_OUT, 1, 1)
    assert jnp.allclose(out, _reference(x, w1, b1, w2, b2), atol=1e-5), "mismatch (SE case)"

    # 2) Small per-pixel case: full-extent lane block, grid over batch only.
    xb = jax.random.normal(jax.random.PRNGKey(1), (2, C_IN, 8, 8), jnp.float32)
    outb = se_block(xb, w1, b1, w2, b2)
    jax.block_until_ready(outb)
    assert jnp.allclose(outb, _reference(xb, w1, b1, w2, b2), atol=1e-5), "mismatch (8x8 case)"

    # 3) Tiled + ragged lane axis: HW=576 with 256-lane blocks -> grid (1, 3), masked tail.
    xc = jax.random.normal(jax.random.PRNGKey(2), (1, C_IN, 24, 24), jnp.float32)
    outc = se_block(xc, w1, b1, w2, b2, tile_l=256)
    jax.block_until_ready(outc)
    assert jnp.allclose(outc, _reference(xc, w1, b1, w2, b2), atol=1e-5), "mismatch (ragged tiled case)"

    print("KERNEL_OK")
</pallas_src>

<mosaic_0001>
module attributes {stable_mosaic.version = 11 : i64} {
  func.func @_se_kernel(%arg0: i32, %arg1: i32, %arg2: memref<1x120x1xf32, #tpu.memory_space<vmem>>, %arg3: memref<32x120xf32, #tpu.memory_space<vmem>>, %arg4: memref<32x1xf32, #tpu.memory_space<vmem>>, %arg5: memref<120x32xf32, #tpu.memory_space<vmem>>, %arg6: memref<120x1xf32, #tpu.memory_space<vmem>>, %arg7: memref<1x120x1xf32, #tpu.memory_space<vmem>>) attributes {dimension_semantics = [#tpu.dimension_semantics<parallel>, #tpu.dimension_semantics<parallel>], iteration_bounds = array<i64: 2, 1>, scalar_prefetch = 0 : i64, scratch_operands = 0 : i64, tpu.core_type = #tpu.core_type<tc>, window_params = [{transform_indices = @transform_0, window_bounds = array<i64: 1, 120, 1>}, {pipeline_mode = #tpu.pipeline_mode<synchronous>, transform_indices = @transform_1, window_bounds = array<i64: 32, 120>}, {pipeline_mode = #tpu.pipeline_mode<synchronous>, transform_indices = @transform_2, window_bounds = array<i64: 32, 1>}, {pipeline_mode = #tpu.pipeline_mode<synchronous>, transform_indices = @transform_3, window_bounds = array<i64: 120, 32>}, {pipeline_mode = #tpu.pipeline_mode<synchronous>, transform_indices = @transform_4, window_bounds = array<i64: 120, 1>}, {transform_indices = @transform_5, window_bounds = array<i64: 1, 120, 1>}]} {
    %c0 = arith.constant 0 : index
    %c0_0 = arith.constant 0 : index
    %c0_1 = arith.constant 0 : index
    %0 = vector.load %arg2[%c0, %c0_0, %c0_1] : memref<1x120x1xf32, #tpu.memory_space<vmem>>, vector<1x120x1xf32>
    %1 = vector.shape_cast %0 : vector<1x120x1xf32> to vector<120x1xf32>
    %c0_2 = arith.constant 0 : index
    %c0_3 = arith.constant 0 : index
    %2 = vector.load %arg3[%c0_2, %c0_3] : memref<32x120xf32, #tpu.memory_space<vmem>>, vector<32x120xf32>
    %cst = arith.constant dense<0.000000e+00> : vector<32x1xf32>
    %3 = tpu.matmul %2, %1, %cst {dimension_numbers = #tpu.dot_dimension_numbers<[1], [0], [0], [1], [0, 0, 1, 1], [], []>} : vector<32x120xf32>, vector<120x1xf32>, vector<32x1xf32> -> vector<32x1xf32>
    %c0_4 = arith.constant 0 : index
    %c0_5 = arith.constant 0 : index
    %4 = vector.load %arg4[%c0_4, %c0_5] : memref<32x1xf32, #tpu.memory_space<vmem>>, vector<32x1xf32>
    %5 = arith.addf %3, %4 : vector<32x1xf32>
    %cst_6 = arith.constant 0.000000e+00 : f32
    %6 = vector.broadcast %cst_6 : f32 to vector<32x1xf32>
    %7 = arith.maximumf %5, %6 : vector<32x1xf32>
    %c0_7 = arith.constant 0 : index
    %c0_8 = arith.constant 0 : index
    %8 = vector.load %arg5[%c0_7, %c0_8] : memref<120x32xf32, #tpu.memory_space<vmem>>, vector<120x32xf32>
    %cst_9 = arith.constant dense<0.000000e+00> : vector<120x1xf32>
    %9 = tpu.matmul %8, %7, %cst_9 {dimension_numbers = #tpu.dot_dimension_numbers<[1], [0], [0], [1], [0, 0, 1, 1], [], []>} : vector<120x32xf32>, vector<32x1xf32>, vector<120x1xf32> -> vector<120x1xf32>
    %c0_10 = arith.constant 0 : index
    %c0_11 = arith.constant 0 : index
    %10 = vector.load %arg6[%c0_10, %c0_11] : memref<120x1xf32, #tpu.memory_space<vmem>>, vector<120x1xf32>
    %11 = arith.addf %9, %10 : vector<120x1xf32>
    %cst_12 = arith.constant 0.166666672 : f32
    %12 = vector.broadcast %cst_12 : f32 to vector<120x1xf32>
    %13 = arith.mulf %11, %12 : vector<120x1xf32>
    %cst_13 = arith.constant 5.000000e-01 : f32
    %14 = vector.broadcast %cst_13 : f32 to vector<120x1xf32>
    %15 = arith.addf %13, %14 : vector<120x1xf32>
    %cst_14 = arith.constant 0.000000e+00 : f32
    %cst_15 = arith.constant 1.000000e+00 : f32
    %16 = vector.broadcast %cst_14 : f32 to vector<120x1xf32>
    %17 = arith.maximumf %16, %15 : vector<120x1xf32>
    %18 = vector.broadcast %cst_15 : f32 to vector<120x1xf32>
    %19 = arith.minimumf %18, %17 : vector<120x1xf32>
    %c0_16 = arith.constant 0 : index
    %c0_17 = arith.constant 0 : index
    %c0_18 = arith.constant 0 : index
    %20 = vector.load %arg7[%c0_16, %c0_17, %c0_18] : memref<1x120x1xf32, #tpu.memory_space<vmem>>, vector<1x120x1xf32>
    %21 = vector.shape_cast %20 : vector<1x120x1xf32> to vector<120x1xf32>
    %22 = vector.shape_cast %19 : vector<120x1xf32> to vector<1x120x1xf32>
    tpu.vector_store %arg7[%c0_16, %c0_17, %c0_18], %22 {strides = array<i32>} : memref<1x120x1xf32, #tpu.memory_space<vmem>>, vector<1x120x1xf32>,
    return
  }
  func.func @transform_0(%arg0: i32, %arg1: i32) -> (i32, i32, i32) {
    %c0_i32 = arith.constant 0 : i32
    %c0_i32_0 = arith.constant 0 : i32
    return %arg0, %c0_i32, %arg1 : i32, i32, i32
  }
  func.func @transform_1(%arg0: i32, %arg1: i32) -> (i32, i32) {
    %c0_i32 = arith.constant 0 : i32
    %c0_i32_0 = arith.constant 0 : i32
    %c0_i32_1 = arith.constant 0 : i32
    return %c0_i32, %c0_i32_0 : i32, i32
  }
  func.func @transform_2(%arg0: i32, %arg1: i32) -> (i32, i32) {
    %c0_i32 = arith.constant 0 : i32
    %c0_i32_0 = arith.constant 0 : i32
    %c0_i32_1 = arith.constant 0 : i32
    return %c0_i32, %c0_i32_0 : i32, i32
  }
  func.func @transform_3(%arg0: i32, %arg1: i32) -> (i32, i32) {
    %c0_i32 = arith.constant 0 : i32
    %c0_i32_0 = arith.constant 0 : i32
    %c0_i32_1 = arith.constant 0 : i32
    return %c0_i32, %c0_i32_0 : i32, i32
  }
  func.func @transform_4(%arg0: i32, %arg1: i32) -> (i32, i32) {
    %c0_i32 = arith.constant 0 : i32
    %c0_i32_0 = arith.constant 0 : i32
    %c0_i32_1 = arith.constant 0 : i32
    return %c0_i32, %c0_i32_0 : i32, i32
  }
  func.func @transform_5(%arg0: i32, %arg1: i32) -> (i32, i32, i32) {
    %c0_i32 = arith.constant 0 : i32
    %c0_i32_0 = arith.constant 0 : i32
    return %arg0, %c0_i32, %arg1 : i32, i32, i32
  }
}

</mosaic_0001>

<llo_original>
// kernel: tpu_custom_call.1
$region0: #{tpu_custom_call.1}
  #allocation0 [shape = 'u32[]', space=smem, size = 0x4, offset = 0x4, fixed_abs, tag = 'smem constant byte address 0x4 - core index']
  #allocation1 [shape = 'u32[144,128]{1,0:T(1,128)}', space=vmem, size = 0x12000, scoped, tag = 'internal scratch']
  %s0 = inlined_call_operand.vmem [shape: f32[2,120,1], index: 0, kind: input, shape index: {}]
  %s1 = inlined_call_operand.vmem [shape: f32[32,120], index: 1, kind: input, shape index: {}]
  %s2 = inlined_call_operand.vmem [shape: f32[32,1], index: 2, kind: input, shape index: {}]
  %s3 = inlined_call_operand.vmem [shape: f32[120,32], index: 3, kind: input, shape index: {}]
  %s4 = inlined_call_operand.vmem [shape: f32[120,1], index: 4, kind: input, shape index: {}]
  %s5 = inlined_call_operand.vmem [shape: f32[2,120,1], index: 5, kind: output, shape index: {}]
  %s6 = sld [smem:[#allocation0]]
  $region53: #{tpu_custom_call.1} parent=0
    _
  %s8 = ssub.s32 1, %s6
  %s9 = scalar_select 0, %s8, %s6
  loop: start=0, step=1, limit=4
  $region2: #{tpu_custom_call.1} parent=0 // loop_pre_header
    _
  $region3: #{tpu_custom_call.1} parent=0 // loop_header
    %s11 = sphi 0, %s15
    %p12 = scmp.ge.s32.totalorder %s11, 4
    %s18 = sphi 0, %s30
    %s19 = sphi 0, %s26
    %s20 = sphi 0, %s18
    %s21 = sphi 0, %s19
    %s22 = sphi 0, %s20
    %s23 = sphi 0, %s21
    %s35 = sphi 0, %s37
    %s38 = sphi 0, %s35
    %s39 = sphi 0, %s38
    %s55 = sphi 0, %s39
    %s59 = sphi 0, %s59
    %s61 = sphi 0, %s59
    %s62 = sphi 0, %s61
    %s76 = sphi 0, %s62
    %s80 = sphi 0, %s80
    %s82 = sphi 0, %s80
    %s83 = sphi 0, %s82
    %s97 = sphi 0, %s83
    %s101 = sphi 0, %s101
    %s103 = sphi 0, %s101
    %s104 = sphi 0, %s103
    %s118 = sphi 0, %s104
    %s122 = sphi 0, %s122
    %s124 = sphi 0, %s122
    %s125 = sphi 0, %s124
    %s139 = sphi 0, %s125
    %s147 = sphi 0, %s149
    %s150 = sphi 0, %s147
    %s151 = sphi 0, %s150
    %s167 = sphi 0, %s151
  $region4: #{tpu_custom_call.1} parent=0 // loop_header_branch
    %14 = sbr.rel (%p12) target = $region8
  $region5: #{tpu_custom_call.1} parent=0 // loop_body
    %s16 = ssub.s32 %s11, 1
    %s17 = ssub.s32 %s11, 2
    %s24 = sadd.s32 1, %s19
    %p25 = scmp.ge.s32.totalorder %s24, 1
    %s26 = scalar_select %p25, 0, %s24
    %s27 = sadd.s32 1, %s18
    %s28 = scalar_select %p25, %s27, %s18
    %p29 = scmp.ge.s32.totalorder %s28, 2
    %s30 = scalar_select %p29, 0, %s28
    %s31 = ssub.s32 %s18, %s30
    %s32 = ssub.s32 %s19, %s26
    %s33 = sor.u32 %s31, %s32
    %p34 = scmp.eq.s32.totalorder %s33, 0
    %s36 = sadd.s32 %s35, 1
    %s37 = scalar_select %p34, %s35, %s36
    %p40 = pneg %p34
    %p41 = scmp.eq.s32.totalorder %s11, 1
    %p42 = por %p40, %p41
    %p43 = scmp.ne.s32.totalorder %s35, %s38
    %p44 = scmp.eq.s32.totalorder %s11, 0
    %p45 = por %p43, %p44
    %p46 = scmp.ne.s32.totalorder %s35, %s38
    %p47 = scmp.eq.s32.totalorder %s16, 1
    %p48 = por %p46, %p47
    %p49 = scmp.ne.s32.totalorder %s38, %s39
    %p50 = scmp.eq.s32.totalorder %s16, 0
    %p51 = por %p49, %p50
    %p52 = scmp.ne.s32.totalorder %s38, %s39
    %p53 = scmp.eq.s32.totalorder %s17, 1
    %p54 = por %p52, %p53
    %p56 = scmp.ne.s32.totalorder %s39, %s55
    %p57 = scmp.eq.s32.totalorder %s17, 0
    %p58 = por %p56, %p57
    %s60 = sadd.s32 %s59, 1
    %p63 = scmp.eq.s32.totalorder %s11, 1
    %p64 = scmp.ne.s32.totalorder %s59, %s61
    %p65 = scmp.eq.s32.totalorder %s11, 0
    %p66 = por %p64, %p65
    %p67 = scmp.ne.s32.totalorder %s59, %s61
    %p68 = scmp.eq.s32.totalorder %s16, 1
    %p69 = por %p67, %p68
    %p70 = scmp.ne.s32.totalorder %s61, %s62
    %p71 = scmp.eq.s32.totalorder %s16, 0
    %p72 = por %p70, %p71
    %p73 = scmp.ne.s32.totalorder %s61, %s62
    %p74 = scmp.eq.s32.totalorder %s17, 1
    %p75 = por %p73, %p74
    %p77 = scmp.ne.s32.totalorder %s62, %s76
    %p78 = scmp.eq.s32.totalorder %s17, 0
    %p79 = por %p77, %p78
    %s81 = sadd.s32 %s80, 1
    %p84 = scmp.eq.s32.totalorder %s11, 1
    %p85 = scmp.ne.s32.totalorder %s80, %s82
    %p86 = scmp.eq.s32.totalorder %s11, 0
    %p87 = por %p85, %p86
    %p88 = scmp.ne.s32.totalorder %s80, %s82
    %p89 = scmp.eq.s32.totalorder %s16, 1
    %p90 = por %p88, %p89
    %p91 = scmp.ne.s32.totalorder %s82, %s83
    %p92 = scmp.eq.s32.totalorder %s16, 0
    %p93 = por %p91, %p92
    %p94 = scmp.ne.s32.totalorder %s82, %s83
    %p95 = scmp.eq.s32.totalorder %s17, 1
    %p96 = por %p94, %p95
    %p98 = scmp.ne.s32.totalorder %s83, %s97
    %p99 = scmp.eq.s32.totalorder %s17, 0
    %p100 = por %p98, %p99
    %s102 = sadd.s32 %s101, 1
    %p105 = scmp.eq.s32.totalorder %s11, 1
    %p106 = scmp.ne.s32.totalorder %s101, %s103
    %p107 = scmp.eq.s32.totalorder %s11, 0
    %p108 = por %p106, %p107
    %p109 = scmp.ne.s32.totalorder %s101, %s103
    %p110 = scmp.eq.s32.totalorder %s16, 1
    %p111 = por %p109, %p110
    %p112 = scmp.ne.s32.totalorder %s103, %s104
    %p113 = scmp.eq.s32.totalorder %s16, 0
    %p114 = por %p112, %p113
    %p115 = scmp.ne.s32.totalorder %s103, %s104
    %p116 = scmp.eq.s32.totalorder %s17, 1
    %p117 = por %p115, %p116
    %p119 = scmp.ne.s32.totalorder %s104, %s118
    %p120 = scmp.eq.s32.totalorder %s17, 0
    %p121 = por %p119, %p120
    %s123 = sadd.s32 %s122, 1
    %p126 = scmp.eq.s32.totalorder %s11, 1
    %p127 = scmp.ne.s32.totalorder %s122, %s124
    %p128 = scmp.eq.s32.totalorder %s11, 0
    %p129 = por %p127, %p128
    %p130 = scmp.ne.s32.totalorder %s122, %s124
    %p131 = scmp.eq.s32.totalorder %s16, 1
    %p132 = por %p130, %p131
    %p133 = scmp.ne.s32.totalorder %s124, %s125
    %p134 = scmp.eq.s32.totalorder %s16, 0
    %p135 = por %p133, %p134
    %p136 = scmp.ne.s32.totalorder %s124, %s125
    %p137 = scmp.eq.s32.totalorder %s17, 1
    %p138 = por %p136, %p137
    %p140 = scmp.ne.s32.totalorder %s125, %s139
    %p141 = scmp.eq.s32.totalorder %s17, 0
    %p142 = por %p140, %p141
    %s143 = ssub.s32 %s18, %s30
    %s144 = ssub.s32 %s19, %s26
    %s145 = sor.u32 %s143, %s144
    %p146 = scmp.eq.s32.totalorder %s145, 0
    %s148 = sadd.s32 %s147, 1
    %s149 = scalar_select %p146, %s147, %s148
    %p152 = pneg %p146
    %p153 = scmp.eq.s32.totalorder %s11, 1
    %p154 = por %p152, %p153
    %p155 = scmp.ne.s32.totalorder %s147, %s150
    %p156 = scmp.eq.s32.totalorder %s11, 0
    %p157 = por %p155, %p156
    %p158 = scmp.ne.s32.totalorder %s147, %s150
    %p159 = scmp.eq.s32.totalorder %s16, 1
    %p160 = por %p158, %p159
    %p161 = scmp.ne.s32.totalorder %s150, %s151
    %p162 = scmp.eq.s32.totalorder %s16, 0
    %p163 = por %p161, %p162
    %p164 = scmp.ne.s32.totalorder %s150, %s151
    %p165 = scmp.eq.s32.totalorder %s17, 1
    %p166 = por %p164, %p165
    %p168 = scmp.ne.s32.totalorder %s151, %s167
    %p169 = scmp.eq.s32.totalorder %s17, 0
    %p170 = por %p168, %p169
    %p171 = scmp.le.s32.totalorder 1, %s11
    %p172 = scmp.lt.s32.totalorder %s11, 3
    %p173 = pnand %p171, %p172
    %p174 = pneg %p173
    // Predicated region
    $region9: #{tpu_custom_call.1} parent=5 // pred_check
      _
    $region10: #{tpu_custom_call.1} parent=5 // pred_check_branch
      %176 = sbr.rel (%p173) target = $region12
    $region11: #{tpu_custom_call.1} parent=5 // pred_region
      %s177 = ssub.s32 %s11, 1
      // Predicated region
      $region13: #{tpu_custom_call.1} parent=11 // pred_check
        %p178 = pneg %p72
      $region14: #{tpu_custom_call.1} parent=11 // pred_check_branch
        %180 = sbr.rel (%p178) target = $region16
      $region15: #{tpu_custom_call.1} parent=11 // pred_region
        _
      $region16: #{tpu_custom_call.1} parent=11 // pred_fallthru
        _
      // Predicated region
      $region17: #{tpu_custom_call.1} parent=11 // pred_check
        %p181 = pneg %p93
      $region18: #{tpu_custom_call.1} parent=11 // pred_check_branch
        %183 = sbr.rel (%p181) target = $region20
      $region19: #{tpu_custom_call.1} parent=11 // pred_region
        _
      $region20: #{tpu_custom_call.1} parent=11 // pred_fallthru
        _
      // Predicated region
      $region21: #{tpu_custom_call.1} parent=11 // pred_check
        %p184 = pneg %p114
      $region22: #{tpu_custom_call.1} parent=11 // pred_check_branch
        %186 = sbr.rel (%p184) target = $region24
      $region23: #{tpu_custom_call.1} parent=11 // pred_region
        _
      $region24: #{tpu_custom_call.1} parent=11 // pred_fallthru
        _
      // Predicated region
      $region25: #{tpu_custom_call.1} parent=11 // pred_check
        %p187 = pneg %p135
      $region26: #{tpu_custom_call.1} parent=11 // pred_check_branch
        %189 = sbr.rel (%p187) target = $region28
      $region27: #{tpu_custom_call.1} parent=11 // pred_region
        _
      $region28: #{tpu_custom_call.1} parent=11 // pred_fallthru
        _
    $region12: #{tpu_custom_call.1} parent=5 // pred_fallthru
      _
    %p190 = scmp.lt.s32.totalorder %s11, 2
    // Predicated region
    $region29: #{tpu_custom_call.1} parent=5 // pred_check
      %p191 = pneg %p190
    $region30: #{tpu_custom_call.1} parent=5 // pred_check_branch
      %193 = sbr.rel (%p191) target = $region32
    $region31: #{tpu_custom_call.1} parent=5 // pred_region
      // Predicated region
      $region33: #{tpu_custom_call.1} parent=31 // pred_check
        %p194 = pneg %p45
      $region34: #{tpu_custom_call.1} parent=31 // pred_check_branch
        %196 = sbr.rel (%p194) target = $region36
      $region35: #{tpu_custom_call.1} parent=31 // pred_region
        %p197 = scmp.lt.s32.totalorder %s18, 1
        %s198 = scalar_select %p197, %s18, 1
        %p199 = scmp.lt.s32.totalorder %s19, 0
        %s200 = scalar_select %p199, %s19, 0
        %s201 = smul.addr %s198, 15
        %s202 = sadd.s32 %s200, %s201
        %s203 = smul.addr %s202, 8
        %s204 = scalar_lea.vmem %s0, %s203
      $region36: #{tpu_custom_call.1} parent=31 // pred_fallthru
        _
    $region32: #{tpu_custom_call.1} parent=5 // pred_fallthru
      _
    %p205 = scmp.le.s32.totalorder 1, %s11
    %p206 = scmp.lt.s32.totalorder %s11, 3
    %p207 = pnand %p205, %p206
    %p208 = pneg %p207
    // Predicated region
    $region37: #{tpu_custom_call.1} parent=5 // pred_check
      _
    $region38: #{tpu_custom_call.1} parent=5 // pred_check_branch
      %210 = sbr.rel (%p207) target = $region40
    $region39: #{tpu_custom_call.1} parent=5 // pred_region
      %s211 = ssub.s32 %s11, 1
      %p212 = scmp.lt.s32.totalorder %s20, 1
      %s213 = scalar_select %p212, %s20, 1
      %p214 = scmp.lt.s32.totalorder %s21, 0
      %s215 = scalar_select %p214, %s21, 0
      %s216 = smul.addr %s213, 15
      %s217 = sadd.s32 %s215, %s216
      %s218 = smul.addr %s217, 8
      %s219 = scalar_lea.vmem %s0, %s218
      %p220 = pneg %p51
      %p221 = pneg %p48
      %p222 = pneg %p72
      %p223 = pneg %p69
      %p224 = pneg %p93
      %p225 = pneg %p90
      %p226 = pneg %p114
      %p227 = pneg %p111
      %p228 = pneg %p135
      %p229 = pneg %p132
      %p230 = pneg %p163
      %p231 = pneg %p160
      %p232 = scmp.lt.s32.totalorder %s20, 1
      %s233 = scalar_select %p232, %s20, 1
      %p234 = scmp.lt.s32.totalorder %s21, 0
      %s235 = scalar_select %p234, %s21, 0
      %s236 = smul.addr %s233, 15
      %s237 = sadd.s32 %s235, %s236
      %s238 = smul.addr %s237, 8
      %s239 = scalar_lea.vmem %s5, %s238
      %p240 = scmp.lt.s32.totalorder %s20, 1
      %s241 = scalar_select %p240, %s20, 1
      %p242 = scmp.lt.s32.totalorder %s21, 0
      %s243 = scalar_select %p242, %s21, 0
      %s244 = smul.addr %s241, 15
      %s245 = sadd.s32 %s243, %s244
      %s246 = smul.addr %s245, 8
      %s247 = scalar_lea.vmem %s0, %s246
      %p248 = scmp.lt.s32.totalorder %s20, 1
      %s249 = scalar_select %p248, %s20, 1
      %p250 = scmp.lt.s32.totalorder %s21, 0
      %s251 = scalar_select %p250, %s21, 0
      %s252 = smul.addr %s249, 15
      %s253 = sadd.s32 %s251, %s252
      %s254 = smul.addr %s253, 8
      %s255 = scalar_lea.vmem %s5, %s254
      %v256 = vld [vmem:[%s247] sm:$0xff]
      %v257 = vld [vmem:[%s247 + $0x8] sm:$0xff]
      %v258 = vld [vmem:[%s247 + $0x10] sm:$0xff]
      %v259 = vld [vmem:[%s247 + $0x18] sm:$0xff]
      %v260 = vld [vmem:[%s247 + $0x20] sm:$0xff]
      %v261 = vld [vmem:[%s247 + $0x28] sm:$0xff]
      %v262 = vld [vmem:[%s247 + $0x30] sm:$0xff]
      %v263 = vld [vmem:[%s247 + $0x38] sm:$0xff]
      %v264 = vld [vmem:[%s247 + $0x40] sm:$0xff]
      %v265 = vld [vmem:[%s247 + $0x48] sm:$0xff]
      %v266 = vld [vmem:[%s247 + $0x50] sm:$0xff]
      %v267 = vld [vmem:[%s247 + $0x58] sm:$0xff]
      %v268 = vld [vmem:[%s247 + $0x60] sm:$0xff]
      %v269 = vld [vmem:[%s247 + $0x68] sm:$0xff]
      %v270 = vld [vmem:[%s247 + $0x70] sm:$0xff]
      %v271 = vld [vmem:[%s1] sm:$0xff]
      %v272 = vld [vmem:[%s1 + $0x8] sm:$0xff]
      %v273 = vld [vmem:[%s1 + $0x10] sm:$0xff]
      %v274 = vld [vmem:[%s1 + $0x18] sm:$0xff]
      %v275 = vld [vmem:[%s2] sm:$0xff]
      %v276 = vld [vmem:[%s2 + $0x8] sm:$0xff]
      %v277 = vld [vmem:[%s2 + $0x10] sm:$0xff]
      %v278 = vld [vmem:[%s2 + $0x18] sm:$0xff]
      %vm279 = vcmask 982016
      %v281 = vsel %vm279, %v271, 0
      %v284 = vsel %vm279, %v272, 0
      %v287 = vsel %vm279, %v273, 0
      %v290 = vsel %vm279, %v274, 0
      %292 = vmatprep.subr.mxu0 0.0
      %293 = vmatpush1.msra.mxu0 %v256
      %294 = vmatprep.subr.mxu0 0.0
      %295 = vmatpush1.msra.mxu0 %v257
      %296 = vmatprep.subr.mxu0 0.0
      %297 = vmatpush1.msra.mxu0 %v258
      %298 = vmatprep.subr.mxu0 0.0
      %299 = vmatpush1.msra.mxu0 %v259
      %300 = vmatprep.subr.mxu0 0.0
      %301 = vmatpush1.msra.mxu0 %v260
      %302 = vmatprep.subr.mxu0 0.0
      %303 = vmatpush1.msra.mxu0 %v261
      %304 = vmatprep.subr.mxu0 0.0
      %305 = vmatpush1.msra.mxu0 %v262
      %306 = vmatprep.subr.mxu0 0.0
      %307 = vmatpush1.msra.mxu0 %v263
      %308 = vmatprep.subr.mxu0 0.0
      %309 = vmatpush1.msra.mxu0 %v264
      %310 = vmatprep.subr.mxu0 0.0
      %311 = vmatpush1.msra.mxu0 %v265
      %312 = vmatprep.subr.mxu0 0.0
      %313 = vmatpush1.msra.mxu0 %v266
      %314 = vmatprep.subr.mxu0 0.0
      %315 = vmatpush1.msra.mxu0 %v267
      %316 = vmatprep.subr.mxu0 0.0
      %317 = vmatpush1.msra.mxu0 %v268
      %318 = vmatprep.subr.mxu0 0.0
      %319 = vmatpush1.msra.mxu0 %v269
      %320 = vmatprep.subr.mxu0 0.0
      %321 = vmatpush1.msra.mxu0 %v270
      %322 = vmatprep.subr.mxu0 0.0
      %323 = vmatpush1.msra.mxu0 0.0
      %324 = vmatprep.subr.mxu0 0.0
      %325 = vmatpush1.msra.mxu0 0.0
      %326 = vmatprep.subr.mxu0 0.0
      %327 = vmatpush1.msra.mxu0 0.0
      %328 = vmatprep.subr.mxu0 0.0
      %329 = vmatpush1.msra.mxu0 0.0
      %330 = vmatprep.subr.mxu0 0.0
      %331 = vmatpush1.msra.mxu0 0.0
      %332 = vmatprep.subr.mxu0 0.0
      %333 = vmatpush1.msra.mxu0 0.0
      %334 = vmatprep.subr.mxu0 0.0
      %335 = vmatpush1.msra.mxu0 0.0
      %336 = vmatprep.subr.mxu0 0.0
      %337 = vmatpush1.msra.mxu0 0.0
      %338 = vmatprep.subr.mxu0 0.0
      %339 = vmatpush1.msra.mxu0 0.0
      %340 = vmatprep.subr.mxu0 0.0
      %341 = vmatpush1.msra.mxu0 0.0
      %342 = vmatprep.subr.mxu0 0.0
      %343 = vmatpush1.msra.mxu0 0.0
      %344 = vmatprep.subr.mxu0 0.0
      %345 = vmatpush1.msra.mxu0 0.0
      %346 = vmatprep.subr.mxu0 0.0
      %347 = vmatpush1.msra.mxu0 0.0
      %348 = vmatprep.subr.mxu0 0.0
      %349 = vmatpush1.msra.mxu0 0.0
      %350 = vmatprep.subr.mxu0 0.0
      %351 = vmatpush1.msra.mxu0 0.0
      %352 = vmatprep.subr.mxu0 0.0
      %353 = vmatpush1.msra.mxu0 0.0
      %354 = vmatprep.subr.mxu0 0.0
      %355 = vmatpush1.msra.mxu0 0.0
      %356 = vmatprep.mubr.f32.mxu0 0.0
      %357 = vmatmul.mubr.f32.gmra.mrb[0].mxu0 %v281
      %v358 = vpop.f32.mrb[0].mxu0
      %v359 = vadd.f32 %v275, %v358
      %v360 = vpop.f32.mrb[0].mxu0
      %361 = vmatprep.mubr.f32.mxu0 0.0
      %362 = vmatmul.mubr.f32.gmra.mrb[0].mxu0 %v284
      %v363 = vpop.f32.mrb[0].mxu0
      %v364 = vadd.f32 %v276, %v363
      %v365 = vpop.f32.mrb[0].mxu0
      %366 = vmatprep.mubr.f32.mxu0 0.0
      %367 = vmatmul.mubr.f32.gmra.mrb[0].mxu0 %v287
      %v368 = vpop.f32.mrb[0].mxu0
      %v369 = vadd.f32 %v277, %v368
      %v370 = vpop.f32.mrb[0].mxu0
      %371 = vmatprep.mubr.f32.mxu0 0.0
      %372 = vmatmul.mubr.f32.gmra.mrb[0].mxu0 %v290
      %v373 = vpop.f32.mrb[0].mxu0
      %v374 = vadd.f32 %v278, %v373
      %v375 = vpop.f32.mrb[0].mxu0
      %376 = vdwg.mxu0
      %v377 = vmax.f32 %v359, 0.0
      %v378 = vmax.f32 %v364, 0.0
      %v379 = vmax.f32 %v369, 0.0
      %v380 = vmax.f32 %v374, 0.0
      %v381 = vld [vmem:[%s3] sm:$0xff]
      %v382 = vld [vmem:[%s3 + $0x8] sm:$0xff]
      %v383 = vld [vmem:[%s3 + $0x10] sm:$0xff]
      %v384 = vld [vmem:[%s3 + $0x18] sm:$0xff]
      %v385 = vld [vmem:[%s3 + $0x20] sm:$0xff]
      %v386 = vld [vmem:[%s3 + $0x28] sm:$0xff]
      %v387 = vld [vmem:[%s3 + $0x30] sm:$0xff]
      %v388 = vld [vmem:[%s3 + $0x38] sm:$0xff]
      %v389 = vld [vmem:[%s3 + $0x40] sm:$0xff]
      %v390 = vld [vmem:[%s3 + $0x48] sm:$0xff]
      %v391 = vld [vmem:[%s3 + $0x50] sm:$0xff]
      %v392 = vld [vmem:[%s3 + $0x58] sm:$0xff]
      %v393 = vld [vmem:[%s3 + $0x60] sm:$0xff]
      %v394 = vld [vmem:[%s3 + $0x68] sm:$0xff]
      %v395 = vld [vmem:[%s3 + $0x70] sm:$0xff]
      %v396 = vld [vmem:[%s4] sm:$0xff]
      %v397 = vld [vmem:[%s4 + $0x8] sm:$0xff]
      %v398 = vld [vmem:[%s4 + $0x10] sm:$0xff]
      %v399 = vld [vmem:[%s4 + $0x18] sm:$0xff]
      %v400 = vld [vmem:[%s4 + $0x20] sm:$0xff]
      %v401 = vld [vmem:[%s4 + $0x28] sm:$0xff]
      %v402 = vld [vmem:[%s4 + $0x30] sm:$0xff]
      %v403 = vld [vmem:[%s4 + $0x38] sm:$0xff]
      %v404 = vld [vmem:[%s4 + $0x40] sm:$0xff]
      %v405 = vld [vmem:[%s4 + $0x48] sm:$0xff]
      %v406 = vld [vmem:[%s4 + $0x50] sm:$0xff]
      %v407 = vld [vmem:[%s4 + $0x58] sm:$0xff]
      %v408 = vld [vmem:[%s4 + $0x60] sm:$0xff]
      %v409 = vld [vmem:[%s4 + $0x68] sm:$0xff]
      %v410 = vld [vmem:[%s4 + $0x70] sm:$0xff]
      %vm411 = vcmask 261120
      %v413 = vsel %vm411, %v381, 0
      %v416 = vsel %vm411, %v382, 0
      %v419 = vsel %vm411, %v383, 0
      %v422 = vsel %vm411, %v384, 0
      %v425 = vsel %vm411, %v385, 0
      %v428 = vsel %vm411, %v386, 0
      %v431 = vsel %vm411, %v387, 0
      %v434 = vsel %vm411, %v388, 0
      %v437 = vsel %vm411, %v389, 0
      %v440 = vsel %vm411, %v390, 0
      %v443 = vsel %vm411, %v391, 0
      %v446 = vsel %vm411, %v392, 0
      %v449 = vsel %vm411, %v393, 0
      %v452 = vsel %vm411, %v394, 0
      %v455 = vsel %vm411, %v395, 0
      %457 = vmatprep.subr.mxu0 0.0
      %458 = vmatpush1.msra.mxu0 %v377
      %459 = vmatprep.subr.mxu0 0.0
      %460 = vmatpush1.msra.mxu0 %v378
      %461 = vmatprep.subr.mxu0 0.0
      %462 = vmatpush1.msra.mxu0 %v379
      %463 = vmatprep.subr.mxu0 0.0
      %464 = vmatpush1.msra.mxu0 %v380
      %465 = vmatprep.subr.mxu0 0.0
      %466 = vmatpush1.msra.mxu0 0.0
      %467 = vmatprep.subr.mxu0 0.0
      %468 = vmatpush1.msra.mxu0 0.0
      %469 = vmatprep.subr.mxu0 0.0
      %470 = vmatpush1.msra.mxu0 0.0
      %471 = vmatprep.subr.mxu0 0.0
      %472 = vmatpush1.msra.mxu0 0.0
      %473 = vmatprep.subr.mxu0 0.0
      %474 = vmatpush1.msra.mxu0 0.0
      %475 = vmatprep.subr.mxu0 0.0
      %476 = vmatpush1.msra.mxu0 0.0
      %477 = vmatprep.subr.mxu0 0.0
      %478 = vmatpush1.msra.mxu0 0.0
      %479 = vmatprep.subr.mxu0 0.0
      %480 = vmatpush1.msra.mxu0 0.0
      %481 = vmatprep.subr.mxu0 0.0
      %482 = vmatpush1.msra.mxu0 0.0
      %483 = vmatprep.subr.mxu0 0.0
      %484 = vmatpush1.msra.mxu0 0.0
      %485 = vmatprep.subr.mxu0 0.0
      %486 = vmatpush1.msra.mxu0 0.0
      %487 = vmatprep.subr.mxu0 0.0
      %488 = vmatpush1.msra.mxu0 0.0
      %489 = vmatprep.subr.mxu0 0.0
      %490 = vmatpush1.msra.mxu0 0.0
      %491 = vmatprep.subr.mxu0 0.0
      %492 = vmatpush1.msra.mxu0 0.0
      %493 = vmatprep.subr.mxu0 0.0
      %494 = vmatpush1.msra.mxu0 0.0
      %495 = vmatprep.subr.mxu0 0.0
      %496 = vmatpush1.msra.mxu0 0.0
      %497 = vmatprep.subr.mxu0 0.0
      %498 = vmatpush1.msra.mxu0 0.0
      %499 = vmatprep.subr.mxu0 0.0
      %500 = vmatpush1.msra.mxu0 0.0
      %501 = vmatprep.subr.mxu0 0.0
      %502 = vmatpush1.msra.mxu0 0.0
      %503 = vmatprep.subr.mxu0 0.0
      %504 = vmatpush1.msra.mxu0 0.0
      %505 = vmatprep.subr.mxu0 0.0
      %506 = vmatpush1.msra.mxu0 0.0
      %507 = vmatprep.subr.mxu0 0.0
      %508 = vmatpush1.msra.mxu0 0.0
      %509 = vmatprep.subr.mxu0 0.0
      %510 = vmatpush1.msra.mxu0 0.0
      %511 = vmatprep.subr.mxu0 0.0
      %512 = vmatpush1.msra.mxu0 0.0
      %513 = vmatprep.subr.mxu0 0.0
      %514 = vmatpush1.msra.mxu0 0.0
      %515 = vmatprep.subr.mxu0 0.0
      %516 = vmatpush1.msra.mxu0 0.0
      %517 = vmatprep.subr.mxu0 0.0
      %518 = vmatpush1.msra.mxu0 0.0
      %519 = vmatprep.subr.mxu0 0.0
      %520 = vmatpush1.msra.mxu0 0.0
      %521 = vmatprep.mubr.f32.mxu0 0.0
      %522 = vmatmul.mubr.f32.gmra.mrb[0].mxu0 %v413
      %v523 = vpop.f32.mrb[0].mxu0
      %v524 = vadd.f32 %v396, %v523
      %v525 = vpop.f32.mrb[0].mxu0
      %526 = vmatprep.mubr.f32.mxu0 0.0
      %527 = vmatmul.mubr.f32.gmra.mrb[0].mxu0 %v416
      %v528 = vpop.f32.mrb[0].mxu0
      %v529 = vadd.f32 %v397, %v528
      %v530 = vpop.f32.mrb[0].mxu0
      %531 = vmatprep.mubr.f32.mxu0 0.0
      %532 = vmatmul.mubr.f32.gmra.mrb[0].mxu0 %v419
      %v533 = vpop.f32.mrb[0].mxu0
      %v534 = vadd.f32 %v398, %v533
      %v535 = vpop.f32.mrb[0].mxu0
      %536 = vmatprep.mubr.f32.mxu0 0.0
      %537 = vmatmul.mubr.f32.gmra.mrb[0].mxu0 %v422
      %v538 = vpop.f32.mrb[0].mxu0
      %v539 = vadd.f32 %v399, %v538
      %v540 = vpop.f32.mrb[0].mxu0
      %541 = vmatprep.mubr.f32.mxu0 0.0
      %542 = vmatmul.mubr.f32.gmra.mrb[0].mxu0 %v425
      %v543 = vpop.f32.mrb[0].mxu0
      %v544 = vadd.f32 %v400, %v543
      %v545 = vpop.f32.mrb[0].mxu0
      %546 = vmatprep.mubr.f32.mxu0 0.0
      %547 = vmatmul.mubr.f32.gmra.mrb[0].mxu0 %v428
      %v548 = vpop.f32.mrb[0].mxu0
      %v549 = vadd.f32 %v401, %v548
      %v550 = vpop.f32.mrb[0].mxu0
      %551 = vmatprep.mubr.f32.mxu0 0.0
      %552 = vmatmul.mubr.f32.gmra.mrb[0].mxu0 %v431
      %v553 = vpop.f32.mrb[0].mxu0
      %v554 = vadd.f32 %v402, %v553
      %v555 = vpop.f32.mrb[0].mxu0
      %556 = vmatprep.mubr.f32.mxu0 0.0
      %557 = vmatmul.mubr.f32.gmra.mrb[0].mxu0 %v434
      %v558 = vpop.f32.mrb[0].mxu0
      %v559 = vadd.f32 %v403, %v558
      %v560 = vpop.f32.mrb[0].mxu0
      %561 = vmatprep.mubr.f32.mxu0 0.0
      %562 = vmatmul.mubr.f32.gmra.mrb[0].mxu0 %v437
      %v563 = vpop.f32.mrb[0].mxu0
      %v564 = vadd.f32 %v404, %v563
      %v565 = vpop.f32.mrb[0].mxu0
      %566 = vmatprep.mubr.f32.mxu0 0.0
      %567 = vmatmul.mubr.f32.gmra.mrb[0].mxu0 %v440
      %v568 = vpop.f32.mrb[0].mxu0
      %v569 = vadd.f32 %v405, %v568
      %v570 = vpop.f32.mrb[0].mxu0
      %571 = vmatprep.mubr.f32.mxu0 0.0
      %572 = vmatmul.mubr.f32.gmra.mrb[0].mxu0 %v443
      %v573 = vpop.f32.mrb[0].mxu0
      %v574 = vadd.f32 %v406, %v573
      %v575 = vpop.f32.mrb[0].mxu0
      %576 = vmatprep.mubr.f32.mxu0 0.0
      %577 = vmatmul.mubr.f32.gmra.mrb[0].mxu0 %v446
      %v578 = vpop.f32.mrb[0].mxu0
      %v579 = vadd.f32 %v407, %v578
      %v580 = vpop.f32.mrb[0].mxu0
      %581 = vmatprep.mubr.f32.mxu0 0.0
      %582 = vmatmul.mubr.f32.gmra.mrb[0].mxu0 %v449
      %v583 = vpop.f32.mrb[0].mxu0
      %v584 = vadd.f32 %v408, %v583
      %v585 = vpop.f32.mrb[0].mxu0
      %586 = vmatprep.mubr.f32.mxu0 0.0
      %587 = vmatmul.mubr.f32.gmra.mrb[0].mxu0 %v452
      %v588 = vpop.f32.mrb[0].mxu0
      %v589 = vadd.f32 %v409, %v588
      %v590 = vpop.f32.mrb[0].mxu0
      %591 = vmatprep.mubr.f32.mxu0 0.0
      %592 = vmatmul.mubr.f32.gmra.mrb[0].mxu0 %v455
      %v593 = vpop.f32.mrb[0].mxu0
      %v594 = vadd.f32 %v410, %v593
      %v595 = vpop.f32.mrb[0].mxu0
      %596 = vdwg.mxu0
      %v597 = vmul.f32 %v524, 0.16666667
      %v598 = vmul.f32 %v529, 0.16666667
      %v599 = vmul.f32 %v534, 0.16666667
      %v600 = vmul.f32 %v539, 0.16666667
      %v601 = vmul.f32 %v544, 0.16666667
      %v602 = vmul.f32 %v549, 0.16666667
      %v603 = vmul.f32 %v554, 0.16666667
      %v604 = vmul.f32 %v559, 0.16666667
      %v605 = vmul.f32 %v564, 0.16666667
      %v606 = vmul.f32 %v569, 0.16666667
      %v607 = vmul.f32 %v574, 0.16666667
      %v608 = vmul.f32 %v579, 0.16666667
      %v609 = vmul.f32 %v584, 0.16666667
      %v610 = vmul.f32 %v589, 0.16666667
      %v611 = vmul.f32 %v594, 0.16666667
      %v612 = vadd.f32 %v597, 0.5
      %v613 = vadd.f32 %v598, 0.5
      %v614 = vadd.f32 %v599, 0.5
      %v615 = vadd.f32 %v600, 0.5
      %v616 = vadd.f32 %v601, 0.5
      %v617 = vadd.f32 %v602, 0.5
      %v618 = vadd.f32 %v603, 0.5
      %v619 = vadd.f32 %v604, 0.5
      %v620 = vadd.f32 %v605, 0.5
      %v621 = vadd.f32 %v606, 0.5
      %v622 = vadd.f32 %v607, 0.5
      %v623 = vadd.f32 %v608, 0.5
      %v624 = vadd.f32 %v609, 0.5
      %v625 = vadd.f32 %v610, 0.5
      %v626 = vadd.f32 %v611, 0.5
      %v627 = vmax.f32 %v612, 0.0
      %v628 = vmax.f32 %v613, 0.0
      %v629 = vmax.f32 %v614, 0.0
      %v630 = vmax.f32 %v615, 0.0
      %v631 = vmax.f32 %v616, 0.0
      %v632 = vmax.f32 %v617, 0.0
      %v633 = vmax.f32 %v618, 0.0
      %v634 = vmax.f32 %v619, 0.0
      %v635 = vmax.f32 %v620, 0.0
      %v636 = vmax.f32 %v621, 0.0
      %v637 = vmax.f32 %v622, 0.0
      %v638 = vmax.f32 %v623, 0.0
      %v639 = vmax.f32 %v624, 0.0
      %v640 = vmax.f32 %v625, 0.0
      %v641 = vmax.f32 %v626, 0.0
      %v642 = vmin.f32 %v627, 1.0
      %v643 = vmin.f32 %v628, 1.0
      %v644 = vmin.f32 %v629, 1.0
      %v645 = vmin.f32 %v630, 1.0
      %v646 = vmin.f32 %v631, 1.0
      %v647 = vmin.f32 %v632, 1.0
      %v648 = vmin.f32 %v633, 1.0
      %v649 = vmin.f32 %v634, 1.0
      %v650 = vmin.f32 %v635, 1.0
      %v651 = vmin.f32 %v636, 1.0
      %v652 = vmin.f32 %v637, 1.0
      %v653 = vmin.f32 %v638, 1.0
      %v654 = vmin.f32 %v639, 1.0
      %v655 = vmin.f32 %v640, 1.0
      %v656 = vmin.f32 %v641, 1.0
      %vm657 = vcmask 7168
      %658 = vst.msk [vmem:[%s255] sm:$0xff] %vm657, %v642
      %659 = vst.msk [vmem:[%s255 + $0x8] sm:$0xff] %vm657, %v643
      %660 = vst.msk [vmem:[%s255 + $0x10] sm:$0xff] %vm657, %v644
      %661 = vst.msk [vmem:[%s255 + $0x18] sm:$0xff] %vm657, %v645
      %662 = vst.msk [vmem:[%s255 + $0x20] sm:$0xff] %vm657, %v646
      %663 = vst.msk [vmem:[%s255 + $0x28] sm:$0xff] %vm657, %v647
      %664 = vst.msk [vmem:[%s255 + $0x30] sm:$0xff] %vm657, %v648
      %665 = vst.msk [vmem:[%s255 + $0x38] sm:$0xff] %vm657, %v649
      %666 = vst.msk [vmem:[%s255 + $0x40] sm:$0xff] %vm657, %v650
      %667 = vst.msk [vmem:[%s255 + $0x48] sm:$0xff] %vm657, %v651
      %668 = vst.msk [vmem:[%s255 + $0x50] sm:$0xff] %vm657, %v652
      %669 = vst.msk [vmem:[%s255 + $0x58] sm:$0xff] %vm657, %v653
      %670 = vst.msk [vmem:[%s255 + $0x60] sm:$0xff] %vm657, %v654
      %671 = vst.msk [vmem:[%s255 + $0x68] sm:$0xff] %vm657, %v655
      %672 = vst.msk [vmem:[%s255 + $0x70] sm:$0xff] %vm657, %v656
      %p673 = scmp.lt.s32.totalorder %s20, 1
      %s674 = scalar_select %p673, %s20, 1
      %p675 = scmp.lt.s32.totalorder %s21, 0
      %s676 = scalar_select %p675, %s21, 0
      %s677 = smul.addr %s674, 15
      %s678 = sadd.s32 %s676, %s677
      %s679 = smul.addr %s678, 8
      %s680 = scalar_lea.vmem %s5, %s679
      // Predicated region
      $region41: #{tpu_custom_call.1} parent=39 // pred_check
        %p681 = pneg %p160
      $region42: #{tpu_custom_call.1} parent=39 // pred_check_branch
        %683 = sbr.rel (%p681) target = $region44
      $region43: #{tpu_custom_call.1} parent=39 // pred_region
        _
      $region44: #{tpu_custom_call.1} parent=39 // pred_fallthru
        _
    $region40: #{tpu_custom_call.1} parent=5 // pred_fallthru
      _
    %p684 = scmp.le.s32.totalorder 2, %s11
    // Predicated region
    $region45: #{tpu_custom_call.1} parent=5 // pred_check
      %p685 = pneg %p684
    $region46: #{tpu_custom_call.1} parent=5 // pred_check_branch
      %687 = sbr.rel (%p685) target = $region48
    $region47: #{tpu_custom_call.1} parent=5 // pred_region
      %s688 = ssub.s32 %s11, 2
      // Predicated region
      $region49: #{tpu_custom_call.1} parent=47 // pred_check
        %p689 = pneg %p166
      $region50: #{tpu_custom_call.1} parent=47 // pred_check_branch
        %691 = sbr.rel (%p689) target = $region52
      $region51: #{tpu_custom_call.1} parent=47 // pred_region
        %p692 = scmp.lt.s32.totalorder %s22, 1
        %s693 = scalar_select %p692, %s22, 1
        %p694 = scmp.lt.s32.totalorder %s23, 0
        %s695 = scalar_select %p694, %s23, 0
        %s696 = smul.addr %s693, 15
        %s697 = sadd.s32 %s695, %s696
        %s698 = smul.addr %s697, 8
        %s699 = scalar_lea.vmem %s5, %s698
      $region52: #{tpu_custom_call.1} parent=47 // pred_fallthru
        _
    $region48: #{tpu_custom_call.1} parent=5 // pred_fallthru
      _
  $region6: #{tpu_custom_call.1} parent=0 // loop_footer
    %s15 = sadd.s32 1, %s11
  $region7: #{tpu_custom_call.1} parent=0 // loop_footer_branch
    %10 = sbr.rel target = $region3
  $region8: #{tpu_custom_call.1} parent=0 // loop_exit
    _

</llo_original>
